<compile_context>
chip_gen: v7x
topology: tpu7x:2x2x1
jax: 0.10.0
libtpu: 0.0.40
codegen_flags: <defaults>
</compile_context>

<pallas_src>
import functools

import jax
import jax.numpy as jnp
from jax import lax
from jax.experimental import pallas as pl
from jax.experimental.pallas import tpu as pltpu


def _rmsnorm_kernel(x_ref, w_ref, o_ref, *, eps: float, low_precision_scale: bool):
    # x_ref: (tm, D), w_ref: (1, D), o_ref: (tm, D)
    xf = x_ref[...].astype(jnp.float32)
    ms = jnp.mean(xf * xf, axis=-1, keepdims=True)   # (tm, 1)  XLU cross-lane reduce
    inv = lax.rsqrt(ms + eps)                         # EUP

    if low_precision_scale:
        # v6e/v7x bf16 VALU path: keep only the reduce/rsqrt in f32, scale in bf16.
        o_ref[...] = (
            x_ref[...] * inv.astype(x_ref.dtype) * w_ref[...].astype(x_ref.dtype)
        ).astype(o_ref.dtype)
    else:
        # f32 path (f32 inputs, or v5e which has no bf16 VALU). Re-read x_ref so
        # the f32 temp from the reduce doesn't have to stay live.
        o_ref[...] = (
            x_ref[...].astype(jnp.float32) * inv * w_ref[...].astype(jnp.float32)
        ).astype(o_ref.dtype)


def _round_up(x: int, m: int) -> int:
    return ((x + m - 1) // m) * m


def _sublane(itemsize: int) -> int:
    # Rows per packed vreg sublane tile: 8 for f32, 16 for bf16, 32 for int8/fp8.
    return max(8, 32 // max(1, itemsize))


def _choose_row_tile(m: int, d: int, itemsize: int, target_bytes: int) -> int:
    """Row tile: ~target_bytes per x tile, rounded to the dtype's sublane packing."""
    sub = _sublane(itemsize)
    if m <= sub:
        return m  # single full-extent block (always a legal block shape)
    tm = target_bytes // max(1, d * itemsize)
    tm = max(sub, (tm // sub) * sub)
    tm = min(tm, (m // sub) * sub)  # never exceed the array's row extent
    # Keep >= 2 grid steps when rows allow it so v7x's two TensorCores both work
    # (harmless on single-TC v5e/v6e: just one extra ~0.35 us grid step).
    if pl.cdiv(m, tm) < 2:
        tm_half = _round_up(pl.cdiv(m, 2), sub)
        if pl.cdiv(m, tm_half) >= 2:
            tm = min(tm, tm_half)
    return tm


def _tpu_generation() -> str:
    try:
        kind = jax.devices()[0].device_kind.lower()
    except Exception:
        return "unknown"
    if "v7" in kind:
        return "v7"
    if "v5 lite" in kind or "v5lite" in kind or "v5e" in kind:
        return "v5e"
    if "v6" in kind:
        return "v6"
    return "other"


def rms_norm(x: jax.Array, weight: jax.Array, eps: float = 1e-6) -> jax.Array:
    """RMSNorm over the last dim. x: (..., D), weight: (D,)."""
    orig_shape = x.shape
    d = orig_shape[-1]
    assert weight.shape == (d,), (weight.shape, d)

    x2d = x.reshape(-1, d)
    m = x2d.shape[0]
    itemsize = jnp.dtype(x2d.dtype).itemsize

    gen = _tpu_generation()
    if gen == "v7":
        # 64 MiB physical VMEM: budget 2x in + 2x out + f32 temp under 48 MiB.
        target_bytes, vmem_limit = 6 << 20, 48 << 20
    elif gen == "unknown":
        target_bytes, vmem_limit = 2 << 20, 32 << 20
    else:
        # v5e/v6e (and other 128 MiB-VMEM parts): raise the scoped limit.
        target_bytes, vmem_limit = 4 << 20, 96 << 20

    # bf16 scale path only where the VPU has bf16 VALU (v6e / v7x).
    low_prec = (x2d.dtype == jnp.bfloat16) and gen in ("v6", "v7")

    tm = _choose_row_tile(m, d, itemsize, target_bytes)
    grid = (pl.cdiv(m, tm),)  # ragged last tile handled in-grid; no host pad/slice

    kernel = functools.partial(
        _rmsnorm_kernel, eps=float(eps), low_precision_scale=low_prec
    )

    cost = pl.CostEstimate(
        flops=3 * m * d,
        transcendentals=m,
        bytes_accessed=2 * m * d * itemsize + d * jnp.dtype(weight.dtype).itemsize,
    )

    w2d = weight.reshape(1, d)

    y2d = pl.pallas_call(
        kernel,
        out_shape=jax.ShapeDtypeStruct((m, d), x.dtype),
        grid=grid,
        in_specs=[
            pl.BlockSpec((tm, d), lambda i: (i, 0)),  # x row tile (lane-dense D)
            pl.BlockSpec((1, d), lambda i: (0, 0)),   # weight (resident, tiny)
        ],
        out_specs=pl.BlockSpec((tm, d), lambda i: (i, 0)),
        compiler_params=pltpu.CompilerParams(
            dimension_semantics=("parallel",),  # independent row tiles -> megacore
            vmem_limit_bytes=vmem_limit,
        ),
        cost_estimate=cost,
    )(x2d, w2d)

    return y2d.reshape(orig_shape)


class RMSNorm:
    """JAX/Pallas port of the PyTorch RMSNorm module."""

    def __init__(self, dim: int, eps: float = 1e-6, param_dtype=jnp.float32):
        self.dim = dim
        self.eps = eps
        self.weight = jnp.ones((dim,), param_dtype)

    def __call__(self, x: jax.Array) -> jax.Array:
        return rms_norm(x, self.weight, self.eps)


def _reference(x, weight, eps):
    xf = x.astype(jnp.float32)
    y = xf * lax.rsqrt(jnp.mean(xf * xf, axis=-1, keepdims=True) + eps)
    return (y * weight.astype(jnp.float32)).astype(x.dtype)


if __name__ == "__main__":
    key = jax.random.PRNGKey(0)
    kx1, kx2, kw = jax.random.split(key, 3)

    dim = 128
    layer = RMSNorm(dim, eps=1e-6)
    # Module init is ones; use a non-trivial weight to exercise the scale path.
    layer.weight = 1.0 + 0.1 * jax.random.normal(kw, (dim,), jnp.float32)

    ok = True

    # Case 1: bf16, tile-divisible rows (batch=2, seq=8).
    x1 = jax.random.normal(kx1, (2, 8, dim), jnp.float32).astype(jnp.bfloat16)
    y1 = jax.block_until_ready(layer(x1))
    ref1 = _reference(x1, layer.weight, layer.eps)
    ok &= y1.shape == x1.shape and y1.dtype == x1.dtype
    ok &= bool(
        jnp.allclose(y1.astype(jnp.float32), ref1.astype(jnp.float32), atol=2e-2, rtol=2e-2)
    )

    # Case 2: f32, ragged row count (batch=2, seq=9 -> M=18 not a tile multiple)
    # exercises the no-pad / in-grid ragged-tail path.
    x2 = jax.random.normal(kx2, (2, 9, dim), jnp.float32)
    y2 = jax.block_until_ready(layer(x2))
    ref2 = _reference(x2, layer.weight, layer.eps)
    ok &= y2.shape == x2.shape and y2.dtype == x2.dtype
    ok &= bool(jnp.allclose(y2, ref2, atol=1e-5, rtol=1e-5))

    assert ok
    print("KERNEL_OK")
</pallas_src>

<mosaic_0001>
module attributes {stable_mosaic.version = 11 : i64} {
  func.func @_rmsnorm_kernel(%arg0: i32, %arg1: memref<16x128xbf16, #tpu.memory_space<vmem>>, %arg2: memref<1x128xf32, #tpu.memory_space<vmem>>, %arg3: memref<16x128xbf16, #tpu.memory_space<vmem>>) attributes {dimension_semantics = [#tpu.dimension_semantics<parallel>], iteration_bounds = array<i64: 1>, scalar_prefetch = 0 : i64, scratch_operands = 0 : i64, tpu.core_type = #tpu.core_type<tc>, window_params = [{transform_indices = @transform_0, window_bounds = array<i64: 16, 128>}, {pipeline_mode = #tpu.pipeline_mode<synchronous>, transform_indices = @transform_1, window_bounds = array<i64: 1, 128>}, {transform_indices = @transform_2, window_bounds = array<i64: 16, 128>}]} {
    %c0 = arith.constant 0 : index
    %c0_0 = arith.constant 0 : index
    %0 = vector.load %arg1[%c0, %c0_0] : memref<16x128xbf16, #tpu.memory_space<vmem>>, vector<16x128xbf16>
    %1 = arith.extf %0 : vector<16x128xbf16> to vector<16x128xf32>
    %2 = arith.mulf %1, %1 : vector<16x128xf32>
    %cst = arith.constant dense<0.000000e+00> : vector<16xf32>
    %3 = vector.multi_reduction <add>, %2, %cst [1] : vector<16x128xf32> to vector<16xf32>
    %4 = vector.shape_cast %3 : vector<16xf32> to vector<16x1xf32>
    %cst_1 = arith.constant 1.280000e+02 : f32
    %5 = vector.broadcast %cst_1 : f32 to vector<16x1xf32>
    %6 = arith.divf %4, %5 : vector<16x1xf32>
    %cst_2 = arith.constant 9.99999997E-7 : f32
    %7 = vector.broadcast %cst_2 : f32 to vector<16x1xf32>
    %8 = arith.addf %6, %7 : vector<16x1xf32>
    %9 = math.rsqrt %8 : vector<16x1xf32>
    %c0_3 = arith.constant 0 : index
    %c0_4 = arith.constant 0 : index
    %10 = vector.load %arg1[%c0_3, %c0_4] : memref<16x128xbf16, #tpu.memory_space<vmem>>, vector<16x128xbf16>
    %11 = arith.extf %10 : vector<16x128xbf16> to vector<16x128xf32>
    %12 = vector.broadcast %9 : vector<16x1xf32> to vector<16x128xf32>
    %13 = arith.mulf %11, %12 : vector<16x128xf32>
    %c0_5 = arith.constant 0 : index
    %c0_6 = arith.constant 0 : index
    %14 = vector.load %arg2[%c0_5, %c0_6] : memref<1x128xf32, #tpu.memory_space<vmem>>, vector<1x128xf32>
    %15 = vector.broadcast %14 : vector<1x128xf32> to vector<16x128xf32>
    %16 = arith.mulf %13, %15 : vector<16x128xf32>
    %17 = arith.truncf %16 : vector<16x128xf32> to vector<16x128xbf16>
    %c0_7 = arith.constant 0 : index
    %c0_8 = arith.constant 0 : index
    %18 = vector.load %arg3[%c0_7, %c0_8] : memref<16x128xbf16, #tpu.memory_space<vmem>>, vector<16x128xbf16>
    tpu.vector_store %arg3[%c0_7, %c0_8], %17 {strides = array<i32>} : memref<16x128xbf16, #tpu.memory_space<vmem>>, vector<16x128xbf16>,
    return
  }
  func.func @transform_0(%arg0: i32) -> (i32, i32) {
    %c0_i32 = arith.constant 0 : i32
    %c0_i32_0 = arith.constant 0 : i32
    return %arg0, %c0_i32 : i32, i32
  }
  func.func @transform_1(%arg0: i32) -> (i32, i32) {
    %c0_i32 = arith.constant 0 : i32
    %c0_i32_0 = arith.constant 0 : i32
    %c0_i32_1 = arith.constant 0 : i32
    return %c0_i32, %c0_i32_0 : i32, i32
  }
  func.func @transform_2(%arg0: i32) -> (i32, i32) {
    %c0_i32 = arith.constant 0 : i32
    %c0_i32_0 = arith.constant 0 : i32
    return %arg0, %c0_i32 : i32, i32
  }
}

</mosaic_0001>

<llo_original>
// kernel: tpu_custom_call.1
$region0: #{tpu_custom_call.1}
  #allocation0 [shape = 'u32[]', space=smem, size = 0x4, offset = 0x4, fixed_abs, tag = 'smem constant byte address 0x4 - core index']
  #allocation1 [shape = 'u32[144,128]{1,0:T(1,128)}', space=vmem, size = 0x12000, scoped, tag = 'internal scratch']
  %s0 = inlined_call_operand.hbm [shape: bf16[16,128], index: 0, kind: input, shape index: {}]
  %s1 = inlined_call_operand.hbm [shape: f32[1,128], index: 1, kind: input, shape index: {}]
  %s2 = inlined_call_operand.hbm [shape: bf16[16,128], index: 2, kind: output, shape index: {}]
  %s3 = sld [smem:[#allocation0]]
  $region26: #{tpu_custom_call.1} parent=0
    _
  %s5 = ssub.s32 1, %s3
  %s6 = scalar_select 0, %s5, %s3
  $region1: #{tpu_custom_call.1} parent=0
    #allocation2 [shape = 'u8[4096]{0}', space=vmem, size = 0x1000, scoped, tag = 'input window, operand 0, single buffered']
    #allocation3 [shape = 's32[1]{0}', space=sflag, size = 0x4, scoped, tag = 'scoped memory for tpu_custom_call.1']
    #allocation4 [shape = 's32[1]{0}', space=sflag, size = 0x4, scoped, tag = 'scoped memory for tpu_custom_call.1']
    #allocation5 [shape = 'u8[512]{0}', space=vmem, size = 0x400, scoped, tag = 'input window, operand 1, single buffered']
    #allocation6 [shape = 's32[1]{0}', space=sflag, size = 0x4, scoped, tag = 'scoped memory for tpu_custom_call.1']
    #allocation7 [shape = 'u8[4096]{0}', space=vmem, size = 0x1000, scoped, tag = 'output window, operand 0, single buffered']
    %7 = vsyncpa [#allocation3], 0
    %8 = vsyncpa [#allocation6], 0
    %9 = vsyncpa [#allocation4], 0
    // Predicated region
    $region2: #{tpu_custom_call.1} parent=1 // pred_check
      _
    $region3: #{tpu_custom_call.1} parent=1 // pred_check_branch
      %11 = sbr.rel (0) target = $region5
    $region4: #{tpu_custom_call.1} parent=1 // pred_region
      %s13 = ssub.s32 128, 128
      %14 = vsyncadd [#allocation3], %s13
      %s15 = sshll.u32 [#allocation2], 4
      %s16 = int_to_ptr.vmem [resolvable:$true] %s15
      %21 = dma.hbm_to_vmem [thread:$0]  %s0, 128, %s16, [#allocation3], 64, 64, 4
    $region5: #{tpu_custom_call.1} parent=1 // pred_fallthru
      _
    // Predicated region
    $region6: #{tpu_custom_call.1} parent=1 // pred_check
      _
    $region7: #{tpu_custom_call.1} parent=1 // pred_check_branch
      %23 = sbr.rel (0) target = $region9
    $region8: #{tpu_custom_call.1} parent=1 // pred_region
      %s25 = ssub.s32 16, 16
      %26 = vsyncadd [#allocation6], %s25
      %s28 = sshll.u32 [#allocation5], 4
      %s29 = int_to_ptr.vmem [resolvable:$true] %s28
      %31 = dma.hbm_to_vmem [thread:$0]  %s1, 16, %s29, [#allocation6]
    $region9: #{tpu_custom_call.1} parent=1 // pred_fallthru
      _
    // Predicated region
    $region10: #{tpu_custom_call.1} parent=1 // pred_check
      _
    $region11: #{tpu_custom_call.1} parent=1 // pred_check_branch
      %33 = sbr.rel (0) target = $region13
    $region12: #{tpu_custom_call.1} parent=1 // pred_region
      %34 = dma.done [#allocation3], 128
    $region13: #{tpu_custom_call.1} parent=1 // pred_fallthru
      _
    // Predicated region
    $region14: #{tpu_custom_call.1} parent=1 // pred_check
      _
    $region15: #{tpu_custom_call.1} parent=1 // pred_check_branch
      %36 = sbr.rel (0) target = $region17
    $region16: #{tpu_custom_call.1} parent=1 // pred_region
      %37 = dma.done [#allocation6], 16
    $region17: #{tpu_custom_call.1} parent=1 // pred_fallthru
      _
    %v38 = vld [vmem:[#allocation2] sm:$0xf]
    %v39 = vld [vmem:[#allocation2 + $0x4] sm:$0xf]
    %v40 = vunpack.c.l.bf16 %v38
    %v41 = vunpack.c.l.bf16 %v39
    %v42 = vmul.f32 %v40, %v40
    %v43 = vmul.f32 %v41, %v41
    %44 = vadd.xlane.f32.xlu0 %v42
    %v45 = vpop.xlane.xlu0 %44
    %46 = vadd.xlane.f32.xlu0 %v43
    %v47 = vpop.xlane.xlu0 %46
    %v48 = vrcp.pop 128.0
    %v49 = vmul.f32 %v45, %v48
    %v50 = vmul.f32 %v47, %v48
    %v51 = vadd.f32 %v49, 1e-06
    %v52 = vadd.f32 %v50, 1e-06
    %v53 = vrsqrt.pop %v51
    %v54 = vrsqrt.pop %v52
    %v55 = vmul.f32 %v40, %v53
    %v56 = vmul.f32 %v41, %v54
    %v57 = vld [vmem:[#allocation5] sm:$0x1]
    %v59 = vlaneseq
    %v60 = vshrl.u32 %v59, 7
    %v61 = vsub.s32 0, %v60
    %v62 = vrot.slane %v57, %v61
    %v64 = vmul.f32 %v55, %v62
    %v65 = vmul.f32 %v56, %v62
    %v66 = vpack.c.bf16 %v65, %v64
    %v68 = vunpack.c.l.b16 %v66
    %v69 = vunpack.c.h.b16 %v66
    %v70 = vpack.c.b16 %v68, %v68
    %v71 = vpack.c.b16 %v69, %v69
    %74 = vst [vmem:[#allocation7] sm:$0xf] %v70
    %75 = vst [vmem:[#allocation7 + $0x4] sm:$0xf] %v71
    // Predicated region
    $region18: #{tpu_custom_call.1} parent=1 // pred_check
      _
    $region19: #{tpu_custom_call.1} parent=1 // pred_check_branch
      %77 = sbr.rel (0) target = $region21
    $region20: #{tpu_custom_call.1} parent=1 // pred_region
      %s79 = ssub.s32 128, 128
      %80 = vsyncadd [#allocation4], %s79
      %s81 = sshll.u32 [#allocation7], 4
      %s82 = int_to_ptr.vmem [resolvable:$true] %s81
      %87 = dma.vmem_to_hbm [thread:$0]  %s82, 128, %s2, [#allocation4], 64, 64, 4
    $region21: #{tpu_custom_call.1} parent=1 // pred_fallthru
      _
    // Predicated region
    $region22: #{tpu_custom_call.1} parent=1 // pred_check
      _
    $region23: #{tpu_custom_call.1} parent=1 // pred_check_branch
      %89 = sbr.rel (0) target = $region25
    $region24: #{tpu_custom_call.1} parent=1 // pred_region
      %90 = dma.done [#allocation4], 128
    $region25: #{tpu_custom_call.1} parent=1 // pred_fallthru
      _
    %91 = vsyncpa [#allocation3], 1
    %92 = vsyncpa [#allocation6], 1
    %93 = vsyncpa [#allocation4], 1

</llo_original>
